<compile_context>
chip_gen: v7x
topology: tpu7x:2x2x1
jax: 0.10.0
libtpu: 0.0.40
codegen_flags: <defaults>
</compile_context>

<pallas_src>
import functools

import jax
import jax.numpy as jnp
from jax.experimental import pallas as pl
from jax.experimental.pallas import tpu as pltpu


def _round_up(x, m):
    return ((x + m - 1) // m) * m


def _cdiv(a, b):
    return (a + b - 1) // b


def _vmem_budget_bytes():
    """Physical VMEM per TensorCore minus a safety margin for compiler scratch."""
    cap = 64 << 20  # conservative fallback (v7x per-TC VMEM)
    try:
        info = pltpu.get_tpu_info()
        cap = int(getattr(info, "vmem_capacity_bytes", cap))
    except Exception:
        pass
    return max(cap - (8 << 20), 16 << 20)


# ----------------------------------------------------------------------------
# Kernels
# ----------------------------------------------------------------------------
def _linear_kernel_resident_w(x_ref, w_ref, b_ref, o_ref):
    # Whole (Dp, Cp) weight is resident in VMEM: single MXU matmul, f32 bias add,
    # one lane-dense store per batch tile.  No scratch, no reduction grid axis.
    o_ref[...] = (
        jnp.dot(x_ref[...], w_ref[...], preferred_element_type=jnp.float32)
        + b_ref[...]
    ).astype(o_ref.dtype)


def _linear_kernel_ktiled(x_ref, w_ref, b_ref, o_ref):
    # Reduction over the feature axis = grid axis 1 (innermost, "arbitrary").
    # The f32 output tile is resident across k (its block index ignores k), so
    # accumulate directly into o_ref; initialize it with the broadcast bias at
    # k == 0.  NOTE: correctness of this pattern requires the reduction axis to
    # remain the LAST grid axis — do not reorder the grid.
    k = pl.program_id(1)

    @pl.when(k == 0)
    def _():
        o_ref[...] = jnp.broadcast_to(b_ref[...], o_ref.shape)

    o_ref[...] += jnp.dot(x_ref[...], w_ref[...], preferred_element_type=jnp.float32)


# ----------------------------------------------------------------------------
# Wrapper
# ----------------------------------------------------------------------------
@functools.partial(
    jax.jit, static_argnames=("tb", "tk", "use_bf16_inputs", "force_ktiled")
)
def logistic_regression_forward(
    x, w, b, *, tb=None, tk=None, use_bf16_inputs=False, force_ktiled=False
):
    """out = x @ w + b   (torch nn.Linear with w = weight.T pre-transposed).

    x: (B, D), w: (D, C), b: (C,).
    """
    B, D = x.shape
    Dw, C = w.shape
    assert D == Dw, (D, Dw)

    sublane = 16 if use_bf16_inputs else 8      # bf16 packs 2 rows per sublane
    x_item = 2 if use_bf16_inputs else 4
    w_item = x_item
    out_item = 4                                # kernel always accumulates/stores f32

    Cp = _round_up(C, 128)                      # lane-dense output / weight width
    Dp_full = _round_up(D, 128)

    vmem_budget = _vmem_budget_bytes()
    big_vmem = vmem_budget >= (96 << 20)        # v5e/v6e (128 MiB) vs v7x (64 MiB)
    HEADROOM = 4 << 20

    if tb is None:
        tb = 1024 if big_vmem else 512
    if tk is None:
        tk = 2048 if big_vmem else 1024

    # ---- batch tile: multiple of the sublane packing, >= 2 tiles when possible
    #      so the "parallel" axis can be split across TensorCores (v7x). ----
    B_pad_unit = _round_up(B, sublane)
    TB = _round_up(min(tb, B_pad_unit), sublane)
    if B_pad_unit // TB < 2 and B_pad_unit >= 2 * sublane:
        TB = _round_up(_cdiv(B, 2), sublane)

    # ---- path selection: keep the whole padded weight resident when it fits ----
    use_resident_w = (not force_ktiled) and (
        2 * Dp_full * Cp * w_item <= min(vmem_budget // 2, 32 << 20)
    )

    TK = Dp_full
    if use_resident_w:
        Dp = Dp_full

        def _fp_res(tb_):
            return (2 * tb_ * Dp * x_item      # x tiles (double-buffered)
                    + 2 * Dp * Cp * w_item     # resident weight (2 bufs, conservative)
                    + 2 * Cp * 4               # bias
                    + 2 * tb_ * Cp * out_item) # out tiles

        while TB > sublane and _fp_res(TB) > vmem_budget - HEADROOM:
            TB = _round_up(TB // 2, sublane)
        if _fp_res(TB) > vmem_budget - HEADROOM:
            use_resident_w = False

    if use_resident_w:
        Dp = Dp_full
        num_k = 1
        footprint = _fp_res(TB)
    else:
        TK = _round_up(min(tk, Dp_full), 128)

        def _fp_kt(tb_, tk_):
            return (2 * tb_ * tk_ * x_item
                    + 2 * tk_ * Cp * w_item
                    + 2 * Cp * 4
                    + 2 * tb_ * Cp * out_item)

        # Shrink TB first (keep TK large — fewer accumulator passes per FLOP).
        while _fp_kt(TB, TK) > vmem_budget - HEADROOM:
            if TB > max(256, sublane):
                TB = _round_up(TB // 2, sublane)
            elif TK > 128:
                TK = _round_up(TK // 2, 128)
            elif TB > sublane:
                TB = _round_up(TB // 2, sublane)
            else:
                break

        Dp = _round_up(D, TK)
        num_k = Dp // TK
        footprint = _fp_kt(TB, TK)

    Bp = _round_up(B, TB)
    num_b = Bp // TB

    # ---- wrapper-side padding, elided when not needed ----
    # TODO(synk): ideally the bf16 cast is fused upstream where x is produced so
    # the kernel reads bf16 straight from HBM (the cast here is an extra pass).
    x_in = x.astype(jnp.bfloat16) if use_bf16_inputs else x
    w_in = w.astype(jnp.bfloat16) if use_bf16_inputs else w

    xp = x_in if (Bp == B and Dp == D) else jnp.pad(x_in, ((0, Bp - B), (0, Dp - D)))
    wp = w_in if (Dp == D and Cp == C) else jnp.pad(w_in, ((0, Dp - D), (0, Cp - C)))
    bp = b.reshape(1, C).astype(jnp.float32)
    if Cp != C:
        bp = jnp.pad(bp, ((0, 0), (0, Cp - C)))

    # ---- cost estimate (k-tiled path re-streams W once per batch tile) ----
    w_hbm_bytes = (1 if use_resident_w else num_b) * Dp * Cp * w_item
    cost = pl.CostEstimate(
        flops=2 * Bp * Dp * Cp,
        transcendentals=0,
        bytes_accessed=Bp * Dp * x_item + w_hbm_bytes + Cp * 4 + Bp * Cp * out_item,
    )

    vmem_limit = min(footprint + HEADROOM, vmem_budget)

    if use_resident_w:
        out = pl.pallas_call(
            _linear_kernel_resident_w,
            out_shape=jax.ShapeDtypeStruct((Bp, Cp), jnp.float32),
            grid=(num_b,),
            in_specs=[
                pl.BlockSpec((TB, Dp), lambda i: (i, 0)),   # x: streams over batch
                pl.BlockSpec((Dp, Cp), lambda i: (0, 0)),   # w: resident, fetched once
                pl.BlockSpec((1, Cp), lambda i: (0, 0)),    # b: resident
            ],
            out_specs=pl.BlockSpec((TB, Cp), lambda i: (i, 0)),
            compiler_params=pltpu.CompilerParams(
                dimension_semantics=("parallel",),
                vmem_limit_bytes=vmem_limit,
            ),
            cost_estimate=cost,
        )(xp, wp, bp)
    else:
        out = pl.pallas_call(
            _linear_kernel_ktiled,
            out_shape=jax.ShapeDtypeStruct((Bp, Cp), jnp.float32),
            grid=(num_b, num_k),
            in_specs=[
                pl.BlockSpec((TB, TK), lambda i, k: (i, k)),  # x
                pl.BlockSpec((TK, Cp), lambda i, k: (k, 0)),  # w (re-streamed per i)
                pl.BlockSpec((1, Cp), lambda i, k: (0, 0)),   # b
            ],
            out_specs=pl.BlockSpec((TB, Cp), lambda i, k: (i, 0)),
            compiler_params=pltpu.CompilerParams(
                # Reduction axis MUST stay last for the bias-init / accumulate
                # pattern inside the kernel.
                dimension_semantics=("parallel", "arbitrary"),
                vmem_limit_bytes=vmem_limit,
            ),
            cost_estimate=cost,
        )(xp, wp, bp)

    # Slice padding off only if padding was added; cast only if input wasn't f32.
    if Bp != B or Cp != C:
        out = out[:B, :C]
    if out.dtype != x.dtype:
        out = out.astype(x.dtype)
    return out


if __name__ == "__main__":
    # Small shapes consistent with the module: batch=8, input_size=32, num_classes=16.
    # (At this toy size the kernel is pure launch overhead; the tiling / resident-W /
    #  bf16 wins show up at realistic B/D — the structure above is sized for that.)
    batch, input_size, num_classes = 8, 32, 16

    key = jax.random.PRNGKey(0)
    kx, kw, kb = jax.random.split(key, 3)

    x = jax.random.normal(kx, (batch, input_size), dtype=jnp.float32)

    # Deterministic parameter init mimicking nn.Linear: U(-1/sqrt(in), 1/sqrt(in)).
    bound = 1.0 / (input_size ** 0.5)
    # PyTorch weight shape is (num_classes, input_size); store transposed for the kernel.
    w_pt = jax.random.uniform(kw, (num_classes, input_size),
                              minval=-bound, maxval=bound, dtype=jnp.float32)
    b_pt = jax.random.uniform(kb, (num_classes,),
                              minval=-bound, maxval=bound, dtype=jnp.float32)
    w = w_pt.T  # (input_size, num_classes)

    ref = x @ w + b_pt[None, :]

    # Default (resident-weight, f32) path.
    out = jax.block_until_ready(logistic_regression_forward(x, w, b_pt))
    assert out.shape == (batch, num_classes)
    assert jnp.allclose(out, ref, atol=1e-5, rtol=1e-5)

    # Exercise the k-tiled reduction fallback path.
    out_kt = jax.block_until_ready(
        logistic_regression_forward(x, w, b_pt, force_ktiled=True)
    )
    assert jnp.allclose(out_kt, ref, atol=1e-5, rtol=1e-5)

    # Exercise the bf16-input MXU fast path (f32 accumulation; looser tolerance).
    out_bf16 = jax.block_until_ready(
        logistic_regression_forward(x, w, b_pt, use_bf16_inputs=True)
    )
    assert jnp.allclose(out_bf16, ref, atol=5e-2, rtol=5e-2)

    print("KERNEL_OK")
</pallas_src>

<mosaic_0001>
module attributes {stable_mosaic.version = 11 : i64} {
  func.func @_linear_kernel_resident_w(%arg0: i32, %arg1: memref<8x128xf32, #tpu.memory_space<vmem>>, %arg2: memref<128x128xf32, #tpu.memory_space<vmem>>, %arg3: memref<1x128xf32, #tpu.memory_space<vmem>>, %arg4: memref<8x128xf32, #tpu.memory_space<vmem>>) attributes {dimension_semantics = [#tpu.dimension_semantics<parallel>], iteration_bounds = array<i64: 1>, scalar_prefetch = 0 : i64, scratch_operands = 0 : i64, tpu.core_type = #tpu.core_type<tc>, window_params = [{transform_indices = @transform_0, window_bounds = array<i64: 8, 128>}, {pipeline_mode = #tpu.pipeline_mode<synchronous>, transform_indices = @transform_1, window_bounds = array<i64: 128, 128>}, {pipeline_mode = #tpu.pipeline_mode<synchronous>, transform_indices = @transform_2, window_bounds = array<i64: 1, 128>}, {transform_indices = @transform_3, window_bounds = array<i64: 8, 128>}]} {
    %c0 = arith.constant 0 : index
    %c0_0 = arith.constant 0 : index
    %0 = vector.load %arg1[%c0, %c0_0] : memref<8x128xf32, #tpu.memory_space<vmem>>, vector<8x128xf32>
    %c0_1 = arith.constant 0 : index
    %c0_2 = arith.constant 0 : index
    %1 = vector.load %arg2[%c0_1, %c0_2] : memref<128x128xf32, #tpu.memory_space<vmem>>, vector<128x128xf32>
    %cst = arith.constant dense<0.000000e+00> : vector<8x128xf32>
    %2 = tpu.matmul %0, %1, %cst {dimension_numbers = #tpu.dot_dimension_numbers<[1], [0], [0], [1], [0, 0, 1, 1], [], []>} : vector<8x128xf32>, vector<128x128xf32>, vector<8x128xf32> -> vector<8x128xf32>
    %c0_3 = arith.constant 0 : index
    %c0_4 = arith.constant 0 : index
    %3 = vector.load %arg3[%c0_3, %c0_4] : memref<1x128xf32, #tpu.memory_space<vmem>>, vector<1x128xf32>
    %4 = vector.broadcast %3 : vector<1x128xf32> to vector<8x128xf32>
    %5 = arith.addf %2, %4 : vector<8x128xf32>
    %c0_5 = arith.constant 0 : index
    %c0_6 = arith.constant 0 : index
    %6 = vector.load %arg4[%c0_5, %c0_6] : memref<8x128xf32, #tpu.memory_space<vmem>>, vector<8x128xf32>
    tpu.vector_store %arg4[%c0_5, %c0_6], %5 {strides = array<i32>} : memref<8x128xf32, #tpu.memory_space<vmem>>, vector<8x128xf32>,
    return
  }
  func.func @transform_0(%arg0: i32) -> (i32, i32) {
    %c0_i32 = arith.constant 0 : i32
    %c0_i32_0 = arith.constant 0 : i32
    return %arg0, %c0_i32 : i32, i32
  }
  func.func @transform_1(%arg0: i32) -> (i32, i32) {
    %c0_i32 = arith.constant 0 : i32
    %c0_i32_0 = arith.constant 0 : i32
    %c0_i32_1 = arith.constant 0 : i32
    return %c0_i32, %c0_i32_0 : i32, i32
  }
  func.func @transform_2(%arg0: i32) -> (i32, i32) {
    %c0_i32 = arith.constant 0 : i32
    %c0_i32_0 = arith.constant 0 : i32
    %c0_i32_1 = arith.constant 0 : i32
    return %c0_i32, %c0_i32_0 : i32, i32
  }
  func.func @transform_3(%arg0: i32) -> (i32, i32) {
    %c0_i32 = arith.constant 0 : i32
    %c0_i32_0 = arith.constant 0 : i32
    return %arg0, %c0_i32 : i32, i32
  }
}

</mosaic_0001>

<llo_original>
// kernel: logistic_regression_forward.1
$region0: #{logistic_regression_forward.1}
  #allocation0 [shape = 'u32[]', space=smem, size = 0x4, offset = 0x4, fixed_abs, tag = 'smem constant byte address 0x4 - core index']
  #allocation1 [shape = 'u32[144,128]{1,0:T(1,128)}', space=vmem, size = 0x12000, scoped, tag = 'internal scratch']
  %s0 = inlined_call_operand.vmem [shape: f32[8,128], index: 0, kind: input, shape index: {}]
  %s1 = inlined_call_operand.vmem [shape: f32[128,128], index: 1, kind: input, shape index: {}]
  %s2 = inlined_call_operand.vmem [shape: f32[1,128], index: 2, kind: input, shape index: {}]
  %s3 = inlined_call_operand.hbm [shape: f32[8,128], index: 3, kind: output, shape index: {}]
  %s4 = sld [smem:[#allocation0]]
  $region22: #{logistic_regression_forward.1} parent=0
    _
  %s6 = ssub.s32 1, %s4
  %s7 = scalar_select 0, %s6, %s4
  $region1: #{logistic_regression_forward.1} parent=0
    #allocation2 [shape = 'u8[4096]{0}', space=vmem, size = 0x1000, scoped, tag = 'output window, operand 0, single buffered']
    #allocation3 [shape = 's32[1]{0}', space=sflag, size = 0x4, scoped, tag = 'scoped memory for logistic_regression_forward.1']
    %8 = vsyncpa [#allocation3], 0
    // Predicated region
    $region2: #{logistic_regression_forward.1} parent=1 // pred_check
      _
    $region3: #{logistic_regression_forward.1} parent=1 // pred_check_branch
      %10 = sbr.rel (0) target = $region5
    $region4: #{logistic_regression_forward.1} parent=1 // pred_region
      _
    $region5: #{logistic_regression_forward.1} parent=1 // pred_fallthru
      _
    // Predicated region
    $region6: #{logistic_regression_forward.1} parent=1 // pred_check
      _
    $region7: #{logistic_regression_forward.1} parent=1 // pred_check_branch
      %12 = sbr.rel (0) target = $region9
    $region8: #{logistic_regression_forward.1} parent=1 // pred_region
      _
    $region9: #{logistic_regression_forward.1} parent=1 // pred_fallthru
      _
    // Predicated region
    $region10: #{logistic_regression_forward.1} parent=1 // pred_check
      _
    $region11: #{logistic_regression_forward.1} parent=1 // pred_check_branch
      %14 = sbr.rel (0) target = $region13
    $region12: #{logistic_regression_forward.1} parent=1 // pred_region
      _
    $region13: #{logistic_regression_forward.1} parent=1 // pred_fallthru
      _
    %v15 = vld [vmem:[%s0] sm:$0xff]
    %v16 = vld [vmem:[%s1] sm:$0xff]
    %v17 = vld [vmem:[%s1 + $0x8] sm:$0xff]
    %v18 = vld [vmem:[%s1 + $0x10] sm:$0xff]
    %v19 = vld [vmem:[%s1 + $0x18] sm:$0xff]
    %v20 = vld [vmem:[%s1 + $0x20] sm:$0xff]
    %v21 = vld [vmem:[%s1 + $0x28] sm:$0xff]
    %v22 = vld [vmem:[%s1 + $0x30] sm:$0xff]
    %v23 = vld [vmem:[%s1 + $0x38] sm:$0xff]
    %v24 = vld [vmem:[%s1 + $0x40] sm:$0xff]
    %v25 = vld [vmem:[%s1 + $0x48] sm:$0xff]
    %v26 = vld [vmem:[%s1 + $0x50] sm:$0xff]
    %v27 = vld [vmem:[%s1 + $0x58] sm:$0xff]
    %v28 = vld [vmem:[%s1 + $0x60] sm:$0xff]
    %v29 = vld [vmem:[%s1 + $0x68] sm:$0xff]
    %v30 = vld [vmem:[%s1 + $0x70] sm:$0xff]
    %v31 = vld [vmem:[%s1 + $0x78] sm:$0xff]
    %v32 = vld [vmem:[%s2] sm:$0x1]
    %v34 = vlaneseq
    %v35 = vshrl.u32 %v34, 7
    %v36 = vsub.s32 0, %v35
    %v37 = vrot.slane %v32, %v36
    %39 = vmatprep.subr.mxu0 0.0
    %40 = vmatpush1.msra.mxu0 %v16
    %41 = vmatprep.subr.mxu0 0.0
    %42 = vmatpush1.msra.mxu0 %v17
    %43 = vmatprep.subr.mxu0 0.0
    %44 = vmatpush1.msra.mxu0 %v18
    %45 = vmatprep.subr.mxu0 0.0
    %46 = vmatpush1.msra.mxu0 %v19
    %47 = vmatprep.subr.mxu0 0.0
    %48 = vmatpush1.msra.mxu0 %v20
    %49 = vmatprep.subr.mxu0 0.0
    %50 = vmatpush1.msra.mxu0 %v21
    %51 = vmatprep.subr.mxu0 0.0
    %52 = vmatpush1.msra.mxu0 %v22
    %53 = vmatprep.subr.mxu0 0.0
    %54 = vmatpush1.msra.mxu0 %v23
    %55 = vmatprep.subr.mxu0 0.0
    %56 = vmatpush1.msra.mxu0 %v24
    %57 = vmatprep.subr.mxu0 0.0
    %58 = vmatpush1.msra.mxu0 %v25
    %59 = vmatprep.subr.mxu0 0.0
    %60 = vmatpush1.msra.mxu0 %v26
    %61 = vmatprep.subr.mxu0 0.0
    %62 = vmatpush1.msra.mxu0 %v27
    %63 = vmatprep.subr.mxu0 0.0
    %64 = vmatpush1.msra.mxu0 %v28
    %65 = vmatprep.subr.mxu0 0.0
    %66 = vmatpush1.msra.mxu0 %v29
    %67 = vmatprep.subr.mxu0 0.0
    %68 = vmatpush1.msra.mxu0 %v30
    %69 = vmatprep.subr.mxu0 0.0
    %70 = vmatpush1.msra.mxu0 %v31
    %71 = vmatprep.subr.mxu0 0.0
    %72 = vmatpush1.msra.mxu0 0.0
    %73 = vmatprep.subr.mxu0 0.0
    %74 = vmatpush1.msra.mxu0 0.0
    %75 = vmatprep.subr.mxu0 0.0
    %76 = vmatpush1.msra.mxu0 0.0
    %77 = vmatprep.subr.mxu0 0.0
    %78 = vmatpush1.msra.mxu0 0.0
    %79 = vmatprep.subr.mxu0 0.0
    %80 = vmatpush1.msra.mxu0 0.0
    %81 = vmatprep.subr.mxu0 0.0
    %82 = vmatpush1.msra.mxu0 0.0
    %83 = vmatprep.subr.mxu0 0.0
    %84 = vmatpush1.msra.mxu0 0.0
    %85 = vmatprep.subr.mxu0 0.0
    %86 = vmatpush1.msra.mxu0 0.0
    %87 = vmatprep.subr.mxu0 0.0
    %88 = vmatpush1.msra.mxu0 0.0
    %89 = vmatprep.subr.mxu0 0.0
    %90 = vmatpush1.msra.mxu0 0.0
    %91 = vmatprep.subr.mxu0 0.0
    %92 = vmatpush1.msra.mxu0 0.0
    %93 = vmatprep.subr.mxu0 0.0
    %94 = vmatpush1.msra.mxu0 0.0
    %95 = vmatprep.subr.mxu0 0.0
    %96 = vmatpush1.msra.mxu0 0.0
    %97 = vmatprep.subr.mxu0 0.0
    %98 = vmatpush1.msra.mxu0 0.0
    %99 = vmatprep.subr.mxu0 0.0
    %100 = vmatpush1.msra.mxu0 0.0
    %101 = vmatprep.subr.mxu0 0.0
    %102 = vmatpush1.msra.mxu0 0.0
    %103 = vmatprep.mubr.f32.mxu0 0.0
    %104 = vmatmul.mubr.f32.gmra.mrb[0].mxu0 %v15
    %v105 = vpop.f32.mrb[0].mxu0
    %v106 = vadd.f32 %v37, %v105
    %v107 = vpop.f32.mrb[0].mxu0
    %108 = vdwg.mxu0
    %109 = vst [vmem:[#allocation2] sm:$0xff] %v106
    // Predicated region
    $region14: #{logistic_regression_forward.1} parent=1 // pred_check
      _
    $region15: #{logistic_regression_forward.1} parent=1 // pred_check_branch
      %111 = sbr.rel (0) target = $region17
    $region16: #{logistic_regression_forward.1} parent=1 // pred_region
      %s113 = ssub.s32 128, 128
      %114 = vsyncadd [#allocation3], %s113
      %s116 = sshll.u32 [#allocation2], 4
      %s117 = int_to_ptr.vmem [resolvable:$true] %s116
      %119 = dma.vmem_to_hbm [thread:$0]  %s117, 128, %s3, [#allocation3]
    $region17: #{logistic_regression_forward.1} parent=1 // pred_fallthru
      _
    // Predicated region
    $region18: #{logistic_regression_forward.1} parent=1 // pred_check
      _
    $region19: #{logistic_regression_forward.1} parent=1 // pred_check_branch
      %121 = sbr.rel (0) target = $region21
    $region20: #{logistic_regression_forward.1} parent=1 // pred_region
      %122 = dma.done [#allocation3], 128
    $region21: #{logistic_regression_forward.1} parent=1 // pred_fallthru
      _
    %123 = vsyncpa [#allocation3], 1

</llo_original>
